<compile_context>
chip_gen: v6e
topology: v6e:2x2x1
jax: 0.10.0
libtpu: 0.0.40
codegen_flags: <defaults>
</compile_context>

<pallas_src>
import functools

import jax
import jax.numpy as jnp
from jax.experimental import pallas as pl
from jax.experimental.pallas import tpu as pltpu


TILE_B_MAX = 8192  # batch columns (lanes) per grid step


def _round_up(n: int, m: int) -> int:
    return ((n + m - 1) // m) * m


def _mlp_kernel(x_ref, w1_ref, b1_ref, w2_ref, b2_ref, w3_ref, b3_ref, o_ref):
    # x arrives transposed: (18, TILE_B) bf16, batch on the lane axis.
    x = x_ref[...]

    # (36, 18) @ (18, TILE_B) -> (36, TILE_B), f32 accumulation on the MXU.
    h1 = jnp.dot(w1_ref[...], x, preferred_element_type=jnp.float32) + b1_ref[...]
    h1 = jnp.maximum(h1, 0.0)

    # (18, 36) @ (36, TILE_B) -> (18, TILE_B)
    h2 = jnp.dot(w2_ref[...], h1.astype(w2_ref.dtype),
                 preferred_element_type=jnp.float32) + b2_ref[...]
    h2 = jnp.maximum(h2, 0.0)

    # (2, 18) @ (18, TILE_B) -> (2, TILE_B); lane-dense store.
    h3 = jnp.dot(w3_ref[...], h2.astype(w3_ref.dtype),
                 preferred_element_type=jnp.float32) + b3_ref[...]

    o_ref[...] = h3.astype(o_ref.dtype)


@functools.partial(jax.jit, static_argnames=("tile_b",))
def mlp_forward(x, params, *, tile_b: int | None = None):
    """x: (B, 18) f32.  params: w1..w3 stored (out,in), b1..b3 stored (out,1).

    Returns (B, 2) float32.  x / weights are narrowed to bf16 for the HBM side
    and MXU inputs; accumulation and elementwise work stay f32 in-kernel.
    """
    w1, b1, w2, b2, w3, b3 = (params[k] for k in ("w1", "b1", "w2", "b2", "w3", "b3"))
    B, in_features = x.shape
    out_features = w3.shape[0]

    # Batch tile (lane axis): multiple of 128; aim for >=2 grid steps so the
    # "parallel" grid axis can shard across both v7x TensorCores.
    if tile_b is None:
        half = _round_up(-(-B // 2), 128)          # cdiv(B, 2) rounded to lanes
        tile_b = min(TILE_B_MAX, max(128, half))
    tile_b = max(128, _round_up(tile_b, 128))
    b_pad = _round_up(B, tile_b)

    # Fused cast + transpose in the wrapper: x^T as (18, B_pad) bf16.
    x_t = x.astype(jnp.bfloat16).T
    if b_pad != B:
        x_t = jnp.pad(x_t, ((0, 0), (0, b_pad - B)))
    w1_bf = w1.astype(jnp.bfloat16)
    w2_bf = w2.astype(jnp.bfloat16)
    w3_bf = w3.astype(jnp.bfloat16)

    grid = (b_pad // tile_b,)

    resident = lambda arr: pl.BlockSpec(arr.shape, lambda i: (0, 0))

    flops = 2 * b_pad * (18 * 36 + 36 * 18 + 18 * 2)
    bytes_accessed = (
        b_pad * in_features * 2             # x read (bf16)
        + b_pad * out_features * 4          # output write (f32)
        + (36 * 18 + 18 * 36 + 2 * 18) * 2  # weights (bf16)
        + (36 + 18 + 2) * 4                 # biases (f32)
    )

    out_t = pl.pallas_call(
        _mlp_kernel,
        out_shape=jax.ShapeDtypeStruct((out_features, b_pad), jnp.float32),
        grid=grid,
        in_specs=[
            pl.BlockSpec((in_features, tile_b), lambda i: (0, i)),
            resident(w1_bf), resident(b1),
            resident(w2_bf), resident(b2),
            resident(w3_bf), resident(b3),
        ],
        out_specs=pl.BlockSpec((out_features, tile_b), lambda i: (0, i)),
        compiler_params=pltpu.CompilerParams(
            dimension_semantics=("parallel",),
        ),
        cost_estimate=pl.CostEstimate(
            flops=flops, transcendentals=0, bytes_accessed=bytes_accessed
        ),
    )(x_t, w1_bf, b1, w2_bf, b2, w3_bf, b3)

    # Un-transpose and drop batch padding in the wrapper (cheap XLA ops).
    return out_t[:, :B].T


def mlp_reference(x, params):
    """Pure-JAX reference mirroring the kernel's bf16-input / f32-accum math."""
    cast = lambda a: a.astype(jnp.bfloat16).astype(jnp.float32)
    h = jnp.maximum(cast(x) @ cast(params["w1"]).T + params["b1"].T, 0.0)
    h = jnp.maximum(cast(h) @ cast(params["w2"]).T + params["b2"].T, 0.0)
    return cast(h) @ cast(params["w3"]).T + params["b3"].T


def init_params(key):
    """PyTorch nn.Linear-style init (uniform +/- 1/sqrt(fan_in)).

    Weights stored PyTorch-native (out_features, in_features); biases stored
    (out_features, 1) so they broadcast along the lane (batch) axis in-kernel.
    """
    dims = [(18, 36), (36, 18), (18, 2)]
    params = {}
    keys = jax.random.split(key, 2 * len(dims))
    for i, (fan_in, fan_out) in enumerate(dims):
        bound = 1.0 / jnp.sqrt(float(fan_in))
        w = jax.random.uniform(keys[2 * i], (fan_out, fan_in), jnp.float32, -bound, bound)
        b = jax.random.uniform(keys[2 * i + 1], (fan_out, 1), jnp.float32, -bound, bound)
        params[f"w{i + 1}"] = w
        params[f"b{i + 1}"] = b
    return params


if __name__ == "__main__":
    key = jax.random.PRNGKey(0)
    pkey, xkey, xkey2 = jax.random.split(key, 3)

    params = init_params(pkey)

    # Primary small-shape check: batch=8, features=18 (single 128-lane tile).
    x = jax.random.normal(xkey, (8, 18), dtype=jnp.float32)
    out = jax.block_until_ready(mlp_forward(x, params))
    ref = mlp_reference(x, params)
    assert out.shape == (8, 2)
    assert jnp.allclose(out, ref, atol=1e-3, rtol=1e-3)

    # Secondary check: non-multiple batch with a small forced tile to exercise
    # the multi-tile grid + lane-padding path (grid of 3 x 128-lane tiles).
    x2 = jax.random.normal(xkey2, (300, 18), dtype=jnp.float32)
    out2 = jax.block_until_ready(mlp_forward(x2, params, tile_b=128))
    ref2 = mlp_reference(x2, params)
    assert out2.shape == (300, 2)
    assert jnp.allclose(out2, ref2, atol=1e-3, rtol=1e-3)

    print("KERNEL_OK")
</pallas_src>

<mosaic_0001>
module attributes {stable_mosaic.version = 11 : i64} {
  func.func @_mlp_kernel(%arg0: i32, %arg1: memref<18x128xbf16, #tpu.memory_space<vmem>>, %arg2: memref<36x18xbf16, #tpu.memory_space<vmem>>, %arg3: memref<36x1xf32, #tpu.memory_space<vmem>>, %arg4: memref<18x36xbf16, #tpu.memory_space<vmem>>, %arg5: memref<18x1xf32, #tpu.memory_space<vmem>>, %arg6: memref<2x18xbf16, #tpu.memory_space<vmem>>, %arg7: memref<2x1xf32, #tpu.memory_space<vmem>>, %arg8: memref<2x128xf32, #tpu.memory_space<vmem>>) attributes {dimension_semantics = [#tpu.dimension_semantics<parallel>], iteration_bounds = array<i64: 1>, scalar_prefetch = 0 : i64, scratch_operands = 0 : i64, tpu.core_type = #tpu.core_type<tc>, window_params = [{transform_indices = @transform_0, window_bounds = array<i64: 18, 128>}, {pipeline_mode = #tpu.pipeline_mode<synchronous>, transform_indices = @transform_1, window_bounds = array<i64: 36, 18>}, {pipeline_mode = #tpu.pipeline_mode<synchronous>, transform_indices = @transform_2, window_bounds = array<i64: 36, 1>}, {pipeline_mode = #tpu.pipeline_mode<synchronous>, transform_indices = @transform_3, window_bounds = array<i64: 18, 36>}, {pipeline_mode = #tpu.pipeline_mode<synchronous>, transform_indices = @transform_4, window_bounds = array<i64: 18, 1>}, {pipeline_mode = #tpu.pipeline_mode<synchronous>, transform_indices = @transform_5, window_bounds = array<i64: 2, 18>}, {pipeline_mode = #tpu.pipeline_mode<synchronous>, transform_indices = @transform_6, window_bounds = array<i64: 2, 1>}, {transform_indices = @transform_7, window_bounds = array<i64: 2, 128>}]} {
    %c0 = arith.constant 0 : index
    %c0_0 = arith.constant 0 : index
    %0 = vector.load %arg1[%c0, %c0_0] : memref<18x128xbf16, #tpu.memory_space<vmem>>, vector<18x128xbf16>
    %c0_1 = arith.constant 0 : index
    %c0_2 = arith.constant 0 : index
    %1 = vector.load %arg2[%c0_1, %c0_2] : memref<36x18xbf16, #tpu.memory_space<vmem>>, vector<36x18xbf16>
    %cst = arith.constant dense<0.000000e+00> : vector<36x128xf32>
    %2 = tpu.matmul %1, %0, %cst {dimension_numbers = #tpu.dot_dimension_numbers<[1], [0], [0], [1], [0, 0, 1, 1], [], []>} : vector<36x18xbf16>, vector<18x128xbf16>, vector<36x128xf32> -> vector<36x128xf32>
    %c0_3 = arith.constant 0 : index
    %c0_4 = arith.constant 0 : index
    %3 = vector.load %arg3[%c0_3, %c0_4] : memref<36x1xf32, #tpu.memory_space<vmem>>, vector<36x1xf32>
    %4 = vector.broadcast %3 : vector<36x1xf32> to vector<36x128xf32>
    %5 = arith.addf %2, %4 : vector<36x128xf32>
    %cst_5 = arith.constant 0.000000e+00 : f32
    %6 = vector.broadcast %cst_5 : f32 to vector<36x128xf32>
    %7 = arith.maximumf %5, %6 : vector<36x128xf32>
    %c0_6 = arith.constant 0 : index
    %c0_7 = arith.constant 0 : index
    %8 = vector.load %arg4[%c0_6, %c0_7] : memref<18x36xbf16, #tpu.memory_space<vmem>>, vector<18x36xbf16>
    %9 = arith.truncf %7 : vector<36x128xf32> to vector<36x128xbf16>
    %cst_8 = arith.constant dense<0.000000e+00> : vector<18x128xf32>
    %10 = tpu.matmul %8, %9, %cst_8 {dimension_numbers = #tpu.dot_dimension_numbers<[1], [0], [0], [1], [0, 0, 1, 1], [], []>} : vector<18x36xbf16>, vector<36x128xbf16>, vector<18x128xf32> -> vector<18x128xf32>
    %c0_9 = arith.constant 0 : index
    %c0_10 = arith.constant 0 : index
    %11 = vector.load %arg5[%c0_9, %c0_10] : memref<18x1xf32, #tpu.memory_space<vmem>>, vector<18x1xf32>
    %12 = vector.broadcast %11 : vector<18x1xf32> to vector<18x128xf32>
    %13 = arith.addf %10, %12 : vector<18x128xf32>
    %cst_11 = arith.constant 0.000000e+00 : f32
    %14 = vector.broadcast %cst_11 : f32 to vector<18x128xf32>
    %15 = arith.maximumf %13, %14 : vector<18x128xf32>
    %c0_12 = arith.constant 0 : index
    %c0_13 = arith.constant 0 : index
    %16 = vector.load %arg6[%c0_12, %c0_13] : memref<2x18xbf16, #tpu.memory_space<vmem>>, vector<2x18xbf16>
    %17 = arith.truncf %15 : vector<18x128xf32> to vector<18x128xbf16>
    %cst_14 = arith.constant dense<0.000000e+00> : vector<2x128xf32>
    %18 = tpu.matmul %16, %17, %cst_14 {dimension_numbers = #tpu.dot_dimension_numbers<[1], [0], [0], [1], [0, 0, 1, 1], [], []>} : vector<2x18xbf16>, vector<18x128xbf16>, vector<2x128xf32> -> vector<2x128xf32>
    %c0_15 = arith.constant 0 : index
    %c0_16 = arith.constant 0 : index
    %19 = vector.load %arg7[%c0_15, %c0_16] : memref<2x1xf32, #tpu.memory_space<vmem>>, vector<2x1xf32>
    %20 = vector.broadcast %19 : vector<2x1xf32> to vector<2x128xf32>
    %21 = arith.addf %18, %20 : vector<2x128xf32>
    %c0_17 = arith.constant 0 : index
    %c0_18 = arith.constant 0 : index
    %22 = vector.load %arg8[%c0_17, %c0_18] : memref<2x128xf32, #tpu.memory_space<vmem>>, vector<2x128xf32>
    tpu.vector_store %arg8[%c0_17, %c0_18], %21 {strides = array<i32>} : memref<2x128xf32, #tpu.memory_space<vmem>>, vector<2x128xf32>,
    return
  }
  func.func @transform_0(%arg0: i32) -> (i32, i32) {
    %c0_i32 = arith.constant 0 : i32
    %c0_i32_0 = arith.constant 0 : i32
    return %c0_i32, %arg0 : i32, i32
  }
  func.func @transform_1(%arg0: i32) -> (i32, i32) {
    %c0_i32 = arith.constant 0 : i32
    %c0_i32_0 = arith.constant 0 : i32
    %c0_i32_1 = arith.constant 0 : i32
    return %c0_i32, %c0_i32_0 : i32, i32
  }
  func.func @transform_2(%arg0: i32) -> (i32, i32) {
    %c0_i32 = arith.constant 0 : i32
    %c0_i32_0 = arith.constant 0 : i32
    %c0_i32_1 = arith.constant 0 : i32
    return %c0_i32, %c0_i32_0 : i32, i32
  }
  func.func @transform_3(%arg0: i32) -> (i32, i32) {
    %c0_i32 = arith.constant 0 : i32
    %c0_i32_0 = arith.constant 0 : i32
    %c0_i32_1 = arith.constant 0 : i32
    return %c0_i32, %c0_i32_0 : i32, i32
  }
  func.func @transform_4(%arg0: i32) -> (i32, i32) {
    %c0_i32 = arith.constant 0 : i32
    %c0_i32_0 = arith.constant 0 : i32
    %c0_i32_1 = arith.constant 0 : i32
    return %c0_i32, %c0_i32_0 : i32, i32
  }
  func.func @transform_5(%arg0: i32) -> (i32, i32) {
    %c0_i32 = arith.constant 0 : i32
    %c0_i32_0 = arith.constant 0 : i32
    %c0_i32_1 = arith.constant 0 : i32
    return %c0_i32, %c0_i32_0 : i32, i32
  }
  func.func @transform_6(%arg0: i32) -> (i32, i32) {
    %c0_i32 = arith.constant 0 : i32
    %c0_i32_0 = arith.constant 0 : i32
    %c0_i32_1 = arith.constant 0 : i32
    return %c0_i32, %c0_i32_0 : i32, i32
  }
  func.func @transform_7(%arg0: i32) -> (i32, i32) {
    %c0_i32 = arith.constant 0 : i32
    %c0_i32_0 = arith.constant 0 : i32
    return %c0_i32, %arg0 : i32, i32
  }
}

</mosaic_0001>

<llo_original>
// kernel: mlp_forward.1
$region0: #{mlp_forward.1}
  #allocation0 [shape = 'u32[]', space=smem, size = 0x4, offset = 0x4, fixed_abs, tag = 'smem constant byte address 0x4 - core index']
  #allocation1 [shape = 'u32[144,128]{1,0:T(1,128)}', space=vmem, size = 0x12000, scoped, tag = 'internal scratch']
  %s0 = inlined_call_operand.vmem [shape: bf16[18,128], index: 0, kind: input, shape index: {}]
  %s1 = inlined_call_operand.vmem [shape: bf16[36,18], index: 1, kind: input, shape index: {}]
  %s2 = inlined_call_operand.vmem [shape: f32[36,1], index: 2, kind: input, shape index: {}]
  %s3 = inlined_call_operand.vmem [shape: bf16[18,36], index: 3, kind: input, shape index: {}]
  %s4 = inlined_call_operand.vmem [shape: f32[18,1], index: 4, kind: input, shape index: {}]
  %s5 = inlined_call_operand.vmem [shape: bf16[2,18], index: 5, kind: input, shape index: {}]
  %s6 = inlined_call_operand.vmem [shape: f32[2,1], index: 6, kind: input, shape index: {}]
  %s7 = inlined_call_operand.vmem [shape: f32[2,128], index: 7, kind: output, shape index: {}]
  %s8 = sld [smem:[#allocation0]]
  $region38: #{mlp_forward.1} parent=0
    _
  %s10 = ssub.s32 1, %s8
  %s11 = scalar_select 0, %s10, %s8
  // Predicated region
  $region2: #{mlp_forward.1} parent=0 // pred_check
    _
  $region3: #{mlp_forward.1} parent=0 // pred_check_branch
    %13 = sbr.rel (0) target = $region5
  $region4: #{mlp_forward.1} parent=0 // pred_region
    _
  $region5: #{mlp_forward.1} parent=0 // pred_fallthru
    _
  // Predicated region
  $region6: #{mlp_forward.1} parent=0 // pred_check
    _
  $region7: #{mlp_forward.1} parent=0 // pred_check_branch
    %15 = sbr.rel (0) target = $region9
  $region8: #{mlp_forward.1} parent=0 // pred_region
    _
  $region9: #{mlp_forward.1} parent=0 // pred_fallthru
    _
  // Predicated region
  $region10: #{mlp_forward.1} parent=0 // pred_check
    _
  $region11: #{mlp_forward.1} parent=0 // pred_check_branch
    %17 = sbr.rel (0) target = $region13
  $region12: #{mlp_forward.1} parent=0 // pred_region
    _
  $region13: #{mlp_forward.1} parent=0 // pred_fallthru
    _
  // Predicated region
  $region14: #{mlp_forward.1} parent=0 // pred_check
    _
  $region15: #{mlp_forward.1} parent=0 // pred_check_branch
    %19 = sbr.rel (0) target = $region17
  $region16: #{mlp_forward.1} parent=0 // pred_region
    _
  $region17: #{mlp_forward.1} parent=0 // pred_fallthru
    _
  // Predicated region
  $region18: #{mlp_forward.1} parent=0 // pred_check
    _
  $region19: #{mlp_forward.1} parent=0 // pred_check_branch
    %21 = sbr.rel (0) target = $region21
  $region20: #{mlp_forward.1} parent=0 // pred_region
    _
  $region21: #{mlp_forward.1} parent=0 // pred_fallthru
    _
  // Predicated region
  $region22: #{mlp_forward.1} parent=0 // pred_check
    _
  $region23: #{mlp_forward.1} parent=0 // pred_check_branch
    %23 = sbr.rel (0) target = $region25
  $region24: #{mlp_forward.1} parent=0 // pred_region
    _
  $region25: #{mlp_forward.1} parent=0 // pred_fallthru
    _
  // Predicated region
  $region26: #{mlp_forward.1} parent=0 // pred_check
    _
  $region27: #{mlp_forward.1} parent=0 // pred_check_branch
    %25 = sbr.rel (0) target = $region29
  $region28: #{mlp_forward.1} parent=0 // pred_region
    _
  $region29: #{mlp_forward.1} parent=0 // pred_fallthru
    _
  %v27 = vld [vmem:[%s0] sm:$0xf]
  %v28 = vld [vmem:[%s0 + $0x4] sm:$0xf]
  %v29 = vld [vmem:[%s0 + $0x8] sm:$0x1]
  %v30 = vld [vmem:[%s1] sm:$0xf]
  %v31 = vld [vmem:[%s1 + $0x4] sm:$0xf]
  %v32 = vld [vmem:[%s1 + $0x8] sm:$0xf]
  %v33 = vld [vmem:[%s1 + $0xc] sm:$0xf]
  %v34 = vld [vmem:[%s1 + $0x10] sm:$0x3]
  %v35 = vld [vmem:[%s2] sm:$0xff]
  %v36 = vld [vmem:[%s2 + $0x8] sm:$0xff]
  %v37 = vld [vmem:[%s2 + $0x10] sm:$0xff]
  %v38 = vld [vmem:[%s2 + $0x18] sm:$0xff]
  %v39 = vld [vmem:[%s2 + $0x20] sm:$0xf]
  %41 = vset.pattern.permute.xlu0 0
  %42 = vperm.xlu0 %41, %v35
  %v43 = vpop.permute.xlu0 %42
  %46 = vset.pattern.permute.xlu0 0
  %47 = vperm.xlu0 %46, %v36
  %v48 = vpop.permute.xlu0 %47
  %51 = vset.pattern.permute.xlu0 0
  %52 = vperm.xlu0 %51, %v37
  %v53 = vpop.permute.xlu0 %52
  %56 = vset.pattern.permute.xlu0 0
  %57 = vperm.xlu0 %56, %v38
  %v58 = vpop.permute.xlu0 %57
  %61 = vset.pattern.permute.xlu0 0
  %62 = vperm.xlu0 %61, %v39
  %v63 = vpop.permute.xlu0 %62
  %v70 = vunpack.c.l.b16 %v30
  %v71 = vunpack.c.l.b16 %v31
  %v72 = vunpack.c.l.b16 %v32
  %v73 = vunpack.c.l.b16 %v33
  %v74 = vunpack.c.l.b16 %v34
  %v75 = vpack.c.b16 %v71, %v70
  %v76 = vpack.c.b16 %v73, %v72
  %v77 = vpack.c.b16 %v74, %v74
  %v81 = vunpack.c.l.b16 %v27
  %v82 = vunpack.c.l.b16 %v28
  %v83 = vunpack.c.l.b16 %v29
  %v84 = vpack.c.b16 %v82, %v81
  %v85 = vpack.c.b16 %v83, %v83
  %vm87 = vcmask 146432
  %v89 = vsel %vm87, %v75, 0
  %v92 = vsel %vm87, %v76, 0
  %v95 = vsel %vm87, %v77, 0
  %vm97 = vcmask 1040384
  %v99 = vsel %vm97, %v85, 0
  %101 = vmatprep.subr.bf16.mxu0 0
  %102 = vmatpush1.bf16.msra.mxu0 0
  %103 = vmatprep.subr.bf16.mxu0 0
  %104 = vmatpush1.bf16.msra.mxu0 0
  %105 = vmatprep.subr.bf16.mxu0 0
  %106 = vmatpush1.bf16.msra.mxu0 0
  %107 = vmatprep.subr.bf16.mxu0 0
  %108 = vmatpush1.bf16.msra.mxu0 0
  %109 = vmatprep.subr.bf16.mxu0 0
  %110 = vmatpush1.bf16.msra.mxu0 0
  %111 = vmatprep.subr.bf16.mxu0 0
  %112 = vmatpush1.bf16.msra.mxu0 0
  %113 = vmatprep.subr.bf16.mxu0 0
  %114 = vmatpush1.bf16.msra.mxu0 %v99
  %115 = vmatprep.subr.bf16.mxu0 0
  %116 = vmatpush1.bf16.msra.mxu0 %v84
  %117 = vmatprep.subr.bf16.mxu0 0
  %118 = vmatpush2.bf16.msra.mxu0 0
  %119 = vmatprep.subr.bf16.mxu0 0
  %120 = vmatpush2.bf16.msra.mxu0 0
  %121 = vmatprep.subr.bf16.mxu0 0
  %122 = vmatpush2.bf16.msra.mxu0 0
  %123 = vmatprep.subr.bf16.mxu0 0
  %124 = vmatpush2.bf16.msra.mxu0 0
  %125 = vmatprep.subr.bf16.mxu0 0
  %126 = vmatpush2.bf16.msra.mxu0 0
  %127 = vmatprep.subr.bf16.mxu0 0
  %128 = vmatpush2.bf16.msra.mxu0 0
  %129 = vmatprep.subr.bf16.mxu0 0
  %130 = vmatpush2.bf16.msra.mxu0 0
  %131 = vmatprep.subr.bf16.mxu0 0
  %132 = vmatpush2.bf16.msra.mxu0 0
  %133 = vmatprep.mubr.bf16.mxu0 0
  %134 = vmatmul.mubr.bf16.gmra.mxu0 %v89
  %v135 = vpop.f32.mrf.mxu0
  %v136 = vadd.f32 %v43, %v135
  %v137 = vpop.f32.mrf.mxu0
  %v138 = vpop.f32.mrf.mxu0
  %v139 = vadd.f32 %v48, %v138
  %v140 = vpop.f32.mrf.mxu0
  %141 = vmatprep.mubr.bf16.mxu0 0
  %142 = vmatmul.mubr.bf16.gmra.mxu0 %v92
  %v143 = vpop.f32.mrf.mxu0
  %v144 = vadd.f32 %v53, %v143
  %v145 = vpop.f32.mrf.mxu0
  %v146 = vpop.f32.mrf.mxu0
  %v147 = vadd.f32 %v58, %v146
  %v148 = vpop.f32.mrf.mxu0
  %149 = vmatprep.mubr.bf16.mxu0 0
  %150 = vmatmul.mubr.bf16.gmra.mxu0 %v95
  %v151 = vpop.f32.mrf.mxu0
  %v152 = vadd.f32 %v63, %v151
  %v153 = vpop.f32.mrf.mxu0
  %v154 = vpop.f32.mrf.mxu0
  %v155 = vpop.f32.mrf.mxu0
  %156 = vdwg.mxu0
  %v157 = vmax.f32 %v136, 0.0
  %v158 = vmax.f32 %v139, 0.0
  %v159 = vmax.f32 %v144, 0.0
  %v160 = vmax.f32 %v147, 0.0
  %v161 = vmax.f32 %v152, 0.0
  %v162 = vld [vmem:[%s3] sm:$0xf]
  %v163 = vld [vmem:[%s3 + $0x4] sm:$0xf]
  %v164 = vld [vmem:[%s3 + $0x8] sm:$0x1]
  %v165 = vpack.c.bf16 %v158, %v157
  %v166 = vpack.c.bf16 %v160, %v159
  %v167 = vpack.c.bf16 %v161, %v161
  %v168 = vld [vmem:[%s4] sm:$0xff]
  %v169 = vld [vmem:[%s4 + $0x8] sm:$0xff]
  %v170 = vld [vmem:[%s4 + $0x10] sm:$0x3]
  %172 = vset.pattern.permute.xlu0 0
  %173 = vperm.xlu0 %172, %v168
  %v174 = vpop.permute.xlu0 %173
  %177 = vset.pattern.permute.xlu0 0
  %178 = vperm.xlu0 %177, %v169
  %v179 = vpop.permute.xlu0 %178
  %182 = vset.pattern.permute.xlu0 0
  %183 = vperm.xlu0 %182, %v170
  %v184 = vpop.permute.xlu0 %183
  %v189 = vunpack.c.l.b16 %v162
  %v190 = vunpack.c.l.b16 %v163
  %v191 = vunpack.c.l.b16 %v164
  %v192 = vpack.c.b16 %v190, %v189
  %v193 = vpack.c.b16 %v191, %v191
  %vm194 = vcmask 293888
  %v196 = vsel %vm194, %v192, 0
  %v199 = vsel %vm194, %v193, 0
  %vm201 = vcmask 1041408
  %v203 = vsel %vm201, %v167, 0
  %205 = vmatprep.subr.bf16.mxu0 0
  %206 = vmatpush1.bf16.msra.mxu0 0
  %207 = vmatprep.subr.bf16.mxu0 0
  %208 = vmatpush1.bf16.msra.mxu0 0
  %209 = vmatprep.subr.bf16.mxu0 0
  %210 = vmatpush1.bf16.msra.mxu0 0
  %211 = vmatprep.subr.bf16.mxu0 0
  %212 = vmatpush1.bf16.msra.mxu0 0
  %213 = vmatprep.subr.bf16.mxu0 0
  %214 = vmatpush1.bf16.msra.mxu0 0
  %215 = vmatprep.subr.bf16.mxu0 0
  %216 = vmatpush1.bf16.msra.mxu0 %v203
  %217 = vmatprep.subr.bf16.mxu0 0
  %218 = vmatpush1.bf16.msra.mxu0 %v166
  %219 = vmatprep.subr.bf16.mxu0 0
  %220 = vmatpush1.bf16.msra.mxu0 %v165
  %221 = vmatprep.subr.bf16.mxu0 0
  %222 = vmatpush2.bf16.msra.mxu0 0
  %223 = vmatprep.subr.bf16.mxu0 0
  %224 = vmatpush2.bf16.msra.mxu0 0
  %225 = vmatprep.subr.bf16.mxu0 0
  %226 = vmatpush2.bf16.msra.mxu0 0
  %227 = vmatprep.subr.bf16.mxu0 0
  %228 = vmatpush2.bf16.msra.mxu0 0
  %229 = vmatprep.subr.bf16.mxu0 0
  %230 = vmatpush2.bf16.msra.mxu0 0
  %231 = vmatprep.subr.bf16.mxu0 0
  %232 = vmatpush2.bf16.msra.mxu0 0
  %233 = vmatprep.subr.bf16.mxu0 0
  %234 = vmatpush2.bf16.msra.mxu0 0
  %235 = vmatprep.subr.bf16.mxu0 0
  %236 = vmatpush2.bf16.msra.mxu0 0
  %237 = vmatprep.mubr.bf16.mxu0 0
  %238 = vmatmul.mubr.bf16.gmra.mxu0 %v196
  %v239 = vpop.f32.mrf.mxu0
  %v240 = vadd.f32 %v174, %v239
  %v241 = vpop.f32.mrf.mxu0
  %v242 = vpop.f32.mrf.mxu0
  %v243 = vadd.f32 %v179, %v242
  %v244 = vpop.f32.mrf.mxu0
  %245 = vmatprep.mubr.bf16.mxu0 0
  %246 = vmatmul.mubr.bf16.gmra.mxu0 %v199
  %v247 = vpop.f32.mrf.mxu0
  %v248 = vadd.f32 %v184, %v247
  %v249 = vpop.f32.mrf.mxu0
  %v250 = vpop.f32.mrf.mxu0
  %v251 = vpop.f32.mrf.mxu0
  %252 = vdwg.mxu0
  %v253 = vmax.f32 %v240, 0.0
  %v254 = vmax.f32 %v243, 0.0
  %v255 = vmax.f32 %v248, 0.0
  %v256 = vld [vmem:[%s5] sm:$0x1]
  %v257 = vpack.c.bf16 %v254, %v253
  %v258 = vpack.c.bf16 %v255, %v255
  %v259 = vld [vmem:[%s6] sm:$0x3]
  %261 = vset.pattern.permute.xlu0 0
  %262 = vperm.xlu0 %261, %v259
  %v263 = vpop.permute.xlu0 %262
  %v266 = vsel %vm87, %v256, 0
  %v269 = vsel %vm97, %v258, 0
  %271 = vmatprep.subr.bf16.mxu0 0
  %272 = vmatpush1.bf16.msra.mxu0 0
  %273 = vmatprep.subr.bf16.mxu0 0
  %274 = vmatpush1.bf16.msra.mxu0 0
  %275 = vmatprep.subr.bf16.mxu0 0
  %276 = vmatpush1.bf16.msra.mxu0 0
  %277 = vmatprep.subr.bf16.mxu0 0
  %278 = vmatpush1.bf16.msra.mxu0 0
  %279 = vmatprep.subr.bf16.mxu0 0
  %280 = vmatpush1.bf16.msra.mxu0 0
  %281 = vmatprep.subr.bf16.mxu0 0
  %282 = vmatpush1.bf16.msra.mxu0 0
  %283 = vmatprep.subr.bf16.mxu0 0
  %284 = vmatpush1.bf16.msra.mxu0 %v269
  %285 = vmatprep.subr.bf16.mxu0 0
  %286 = vmatpush1.bf16.msra.mxu0 %v257
  %287 = vmatprep.subr.bf16.mxu0 0
  %288 = vmatpush2.bf16.msra.mxu0 0
  %289 = vmatprep.subr.bf16.mxu0 0
  %290 = vmatpush2.bf16.msra.mxu0 0
  %291 = vmatprep.subr.bf16.mxu0 0
  %292 = vmatpush2.bf16.msra.mxu0 0
  %293 = vmatprep.subr.bf16.mxu0 0
  %294 = vmatpush2.bf16.msra.mxu0 0
  %295 = vmatprep.subr.bf16.mxu0 0
  %296 = vmatpush2.bf16.msra.mxu0 0
  %297 = vmatprep.subr.bf16.mxu0 0
  %298 = vmatpush2.bf16.msra.mxu0 0
  %299 = vmatprep.subr.bf16.mxu0 0
  %300 = vmatpush2.bf16.msra.mxu0 0
  %301 = vmatprep.subr.bf16.mxu0 0
  %302 = vmatpush2.bf16.msra.mxu0 0
  %303 = vmatprep.mubr.bf16.mxu0 0
  %304 = vmatmul.mubr.bf16.gmra.mxu0 %v266
  %v305 = vpop.f32.mrf.mxu0
  %v306 = vadd.f32 %v263, %v305
  %v307 = vpop.f32.mrf.mxu0
  %v308 = vpop.f32.mrf.mxu0
  %v309 = vpop.f32.mrf.mxu0
  %310 = vdwg.mxu0
  %311 = vst [vmem:[%s7] sm:$0x3] %v306
  // Predicated region
  $region30: #{mlp_forward.1} parent=0 // pred_check
    _
  $region31: #{mlp_forward.1} parent=0 // pred_check_branch
    %313 = sbr.rel (0) target = $region33
  $region32: #{mlp_forward.1} parent=0 // pred_region
    _
  $region33: #{mlp_forward.1} parent=0 // pred_fallthru
    _
  // Predicated region
  $region34: #{mlp_forward.1} parent=0 // pred_check
    _
  $region35: #{mlp_forward.1} parent=0 // pred_check_branch
    %315 = sbr.rel (0) target = $region37
  $region36: #{mlp_forward.1} parent=0 // pred_region
    _
  $region37: #{mlp_forward.1} parent=0 // pred_fallthru
    _

</llo_original>
